<compile_context>
chip_gen: v7x
topology: tpu7x:2x2x1
jax: 0.10.0
libtpu: 0.0.40
codegen_flags: <defaults>
</compile_context>

<pallas_src>
import functools

import jax
import jax.numpy as jnp
from jax.experimental import pallas as pl
from jax.experimental.pallas import tpu as pltpu


def _round_up(x: int, m: int) -> int:
    return ((x + m - 1) // m) * m


def _discriminator_kernel(
    # batch-tiled data, transposed layout: [feat, TB] (batch on lanes)
    s_ref, a_ref, ns_ref, masks_ref, logp_ref,
    # g-network params, pre-transposed to [out, in] / [out, 1]
    gw1s_ref, gw1a_ref, gb1_ref, gw2_ref, gb2_ref, gw3_ref, gb3_ref,
    # h-network params
    hw1_ref, hb1_ref, hw2_ref, hb2_ref, hw3_ref, hb3_ref,
    # output: [out_dim, TB] (batch on lanes -> dense lane stores)
    out_ref,
    *, gamma: float, compute_dtype,
):
    f32 = jnp.float32
    cdt = compute_dtype

    s = s_ref[...]
    a = a_ref[...]
    ns = ns_ref[...]

    # ---- g network: g(cat[s, a]) with the concat folded into a split matmul.
    g1 = (jnp.dot(gw1s_ref[...], s, preferred_element_type=f32)
          + jnp.dot(gw1a_ref[...], a, preferred_element_type=f32))
    g1 = jnp.maximum(g1 + gb1_ref[...], 0.0)
    g2 = jnp.maximum(
        jnp.dot(gw2_ref[...], g1.astype(cdt), preferred_element_type=f32)
        + gb2_ref[...], 0.0)
    g3 = (jnp.dot(gw3_ref[...], g2.astype(cdt), preferred_element_type=f32)
          + gb3_ref[...])

    # ---- h network: two lane-packed streams against the same resident
    # weights (no concat copies, no transposes).
    def h_mlp(x):
        y1 = jnp.maximum(
            jnp.dot(hw1_ref[...], x, preferred_element_type=f32)
            + hb1_ref[...], 0.0)
        y2 = jnp.maximum(
            jnp.dot(hw2_ref[...], y1.astype(cdt), preferred_element_type=f32)
            + hb2_ref[...], 0.0)
        return (jnp.dot(hw3_ref[...], y2.astype(cdt),
                        preferred_element_type=f32) + hb3_ref[...])

    h_s = h_mlp(s)
    h_ns = h_mlp(ns)

    out_ref[...] = (g3 + gamma * masks_ref[...] * h_ns - h_s
                    - logp_ref[...]).astype(out_ref.dtype)


def discriminator_forward(states, actions, next_states, masks, log_prob,
                          g_params, h_params, gamma, *,
                          block_batch: int = 2048,
                          compute_dtype=jnp.float32):
    """Discriminator forward. Returns [batch, out_dim] float32.

    Params are [(w1, b1), (w2, b2), (w3, b3)] with weights stored as
    [in_features, out_features] (PyTorch weight transposed) and biases [1, out].
    """
    (gw1, gb1), (gw2, gb2), (gw3, gb3) = g_params
    (hw1, hb1), (hw2, hb2), (hw3, hb3) = h_params

    batch, num_states = states.shape
    out_dim = gw3.shape[1]
    cdt = compute_dtype

    # Batch tile (lane axis): multiple of 128, default up to 2048, capped at
    # ceil(batch/2) so large-enough batches always give >= 2 grid steps
    # (v7x megacore).  The ragged last tile is handled by Pallas (no pad).
    tb_cap = _round_up(max(1, -(-batch // 2)), 128)
    tb = max(128, min(_round_up(block_batch, 128), tb_cap))
    num_tiles = -(-batch // tb)

    # Data prep: transpose to batch-on-lanes; the compute-dtype cast is fused
    # into the same copy, so the kernel DMAs cdt-sized tiles.
    s_t = jnp.transpose(states).astype(cdt)                       # [S, B]
    a_t = jnp.transpose(actions).astype(cdt)                      # [A, B]
    ns_t = jnp.transpose(next_states).astype(cdt)                 # [S, B]
    masks_t = jnp.transpose(jnp.reshape(masks, (batch, -1))).astype(jnp.float32)
    logp_t = jnp.transpose(jnp.reshape(log_prob, (batch, -1))).astype(jnp.float32)

    # Weight prep: [out, in] weights / [out, 1] f32 biases so every in-kernel
    # matmul is W @ X; g's first layer is split (no host/kernel concat).
    gw1s_t = jnp.transpose(gw1[:num_states]).astype(cdt)          # [H1, S]
    gw1a_t = jnp.transpose(gw1[num_states:]).astype(cdt)          # [H1, A]
    gw2_t = jnp.transpose(gw2).astype(cdt)                        # [H2, H1]
    gw3_t = jnp.transpose(gw3).astype(cdt)                        # [out, H2]
    hw1_t = jnp.transpose(hw1).astype(cdt)
    hw2_t = jnp.transpose(hw2).astype(cdt)
    hw3_t = jnp.transpose(hw3).astype(cdt)
    gb1_t = jnp.transpose(gb1).astype(jnp.float32)                # [H1, 1]
    gb2_t = jnp.transpose(gb2).astype(jnp.float32)
    gb3_t = jnp.transpose(gb3).astype(jnp.float32)                # [out, 1]
    hb1_t = jnp.transpose(hb1).astype(jnp.float32)
    hb2_t = jnp.transpose(hb2).astype(jnp.float32)
    hb3_t = jnp.transpose(hb3).astype(jnp.float32)

    def data_spec(rows):
        return pl.BlockSpec((rows, tb), lambda i: (0, i))

    def w_spec(w):
        return pl.BlockSpec(w.shape, lambda i: (0, 0))   # resident weights

    in_specs = [
        data_spec(s_t.shape[0]), data_spec(a_t.shape[0]),
        data_spec(ns_t.shape[0]),
        data_spec(masks_t.shape[0]), data_spec(logp_t.shape[0]),
        w_spec(gw1s_t), w_spec(gw1a_t), w_spec(gb1_t), w_spec(gw2_t),
        w_spec(gb2_t), w_spec(gw3_t), w_spec(gb3_t),
        w_spec(hw1_t), w_spec(hb1_t), w_spec(hw2_t), w_spec(hb2_t),
        w_spec(hw3_t), w_spec(hb3_t),
    ]
    out_spec = pl.BlockSpec((out_dim, tb), lambda i: (0, i))

    kernel = functools.partial(_discriminator_kernel, gamma=float(gamma),
                               compute_dtype=cdt)

    out_t = pl.pallas_call(
        kernel,
        out_shape=jax.ShapeDtypeStruct((out_dim, batch), jnp.float32),
        grid=(num_tiles,),
        in_specs=in_specs,
        out_specs=out_spec,
        compiler_params=pltpu.CompilerParams(
            dimension_semantics=("parallel",)),
    )(s_t, a_t, ns_t, masks_t, logp_t,
      gw1s_t, gw1a_t, gb1_t, gw2_t, gb2_t, gw3_t, gb3_t,
      hw1_t, hb1_t, hw2_t, hb2_t, hw3_t, hb3_t)

    return jnp.transpose(out_t)


def _init_linear(key, in_dim, out_dim):
    """Deterministic Linear init; weight stored transposed as [in, out]."""
    kw, kb = jax.random.split(key)
    bound = 1.0 / jnp.sqrt(jnp.float32(in_dim))
    w = jax.random.uniform(kw, (in_dim, out_dim), jnp.float32, -bound, bound)
    b = jax.random.uniform(kb, (1, out_dim), jnp.float32, -bound, bound)
    return w, b


def _init_mlp(key, input_dim, num_hiddens, output_dim):
    dims = [input_dim] + list(num_hiddens) + [output_dim]
    keys = jax.random.split(key, len(dims) - 1)
    return [_init_linear(keys[i], dims[i], dims[i + 1])
            for i in range(len(dims) - 1)]


def _reference_forward(states, actions, next_states, masks, log_prob,
                       g_params, h_params, gamma):
    def mlp(x, params):
        for i, (w, b) in enumerate(params):
            x = x @ w + b
            if i != len(params) - 1:
                x = jnp.maximum(x, 0.0)
        return x

    sa = jnp.concatenate([states, actions], axis=-1)
    return (mlp(sa, g_params) + gamma * masks * mlp(next_states, h_params)
            - mlp(states, h_params) - log_prob)


if __name__ == "__main__":
    num_states = 16
    num_actions = 8
    num_hiddens = (32, 32)
    n_agent = 3
    gamma = 0.99

    key = jax.random.PRNGKey(0)
    k_g, k_h, k_data = jax.random.split(key, 3)

    def make_data(k, batch):
        ks, ka, kns, km, klp = jax.random.split(k, 5)
        states = jax.random.normal(ks, (batch, num_states), jnp.float32)
        actions = jax.random.normal(ka, (batch, num_actions), jnp.float32)
        next_states = jax.random.normal(kns, (batch, num_states), jnp.float32)
        masks = (jax.random.uniform(km, (batch, 1)) > 0.1).astype(jnp.float32)
        log_prob = jax.random.normal(klp, (batch, 1), jnp.float32)
        return states, actions, next_states, masks, log_prob

    cases = [
        # (name, disc_type, batch, compute_dtype, atol, rtol)
        ("decentralized_small", "decentralized", 8, jnp.float32, 1e-3, 1e-3),
        ("decentralized_tiled", "decentralized", 200, jnp.float32, 1e-3, 1e-3),
        ("centralized_small", "centralized", 8, jnp.float32, 1e-3, 1e-3),
        ("decentralized_bf16", "decentralized", 300, jnp.bfloat16, 5e-2, 5e-2),
    ]

    for name, disc_type, batch, cdt, atol, rtol in cases:
        out_dim = n_agent if disc_type == "centralized" else 1
        g_params = _init_mlp(k_g, num_states + num_actions, num_hiddens, out_dim)
        h_params = _init_mlp(k_h, num_states, num_hiddens, out_dim)
        data = make_data(jax.random.fold_in(k_data, batch), batch)

        out = discriminator_forward(*data, g_params, h_params, gamma,
                                    compute_dtype=cdt)
        out = jax.block_until_ready(out)
        ref = _reference_forward(*data, g_params, h_params, gamma)

        assert out.shape == (batch, out_dim), (name, out.shape)
        max_err = float(jnp.max(jnp.abs(out - ref)))
        assert jnp.allclose(out, ref, atol=atol, rtol=rtol), (name, max_err)

    print("KERNEL_OK")
</pallas_src>

<mosaic_0001>
module attributes {stable_mosaic.version = 11 : i64} {
  func.func @_discriminator_kernel(%arg0: i32, %arg1: memref<16x128xf32, #tpu.memory_space<vmem>>, %arg2: memref<8x128xf32, #tpu.memory_space<vmem>>, %arg3: memref<16x128xf32, #tpu.memory_space<vmem>>, %arg4: memref<1x128xf32, #tpu.memory_space<vmem>>, %arg5: memref<1x128xf32, #tpu.memory_space<vmem>>, %arg6: memref<32x16xf32, #tpu.memory_space<vmem>>, %arg7: memref<32x8xf32, #tpu.memory_space<vmem>>, %arg8: memref<32x1xf32, #tpu.memory_space<vmem>>, %arg9: memref<32x32xf32, #tpu.memory_space<vmem>>, %arg10: memref<32x1xf32, #tpu.memory_space<vmem>>, %arg11: memref<1x32xf32, #tpu.memory_space<vmem>>, %arg12: memref<1x1xf32, #tpu.memory_space<vmem>>, %arg13: memref<32x16xf32, #tpu.memory_space<vmem>>, %arg14: memref<32x1xf32, #tpu.memory_space<vmem>>, %arg15: memref<32x32xf32, #tpu.memory_space<vmem>>, %arg16: memref<32x1xf32, #tpu.memory_space<vmem>>, %arg17: memref<1x32xf32, #tpu.memory_space<vmem>>, %arg18: memref<1x1xf32, #tpu.memory_space<vmem>>, %arg19: memref<1x128xf32, #tpu.memory_space<vmem>>) attributes {dimension_semantics = [#tpu.dimension_semantics<parallel>], iteration_bounds = array<i64: 1>, scalar_prefetch = 0 : i64, scratch_operands = 0 : i64, tpu.core_type = #tpu.core_type<tc>, window_params = [{transform_indices = @transform_0, window_bounds = array<i64: 16, 128>}, {transform_indices = @transform_1, window_bounds = array<i64: 8, 128>}, {transform_indices = @transform_2, window_bounds = array<i64: 16, 128>}, {transform_indices = @transform_3, window_bounds = array<i64: 1, 128>}, {transform_indices = @transform_4, window_bounds = array<i64: 1, 128>}, {pipeline_mode = #tpu.pipeline_mode<synchronous>, transform_indices = @transform_5, window_bounds = array<i64: 32, 16>}, {pipeline_mode = #tpu.pipeline_mode<synchronous>, transform_indices = @transform_6, window_bounds = array<i64: 32, 8>}, {pipeline_mode = #tpu.pipeline_mode<synchronous>, transform_indices = @transform_7, window_bounds = array<i64: 32, 1>}, {pipeline_mode = #tpu.pipeline_mode<synchronous>, transform_indices = @transform_8, window_bounds = array<i64: 32, 32>}, {pipeline_mode = #tpu.pipeline_mode<synchronous>, transform_indices = @transform_9, window_bounds = array<i64: 32, 1>}, {pipeline_mode = #tpu.pipeline_mode<synchronous>, transform_indices = @transform_10, window_bounds = array<i64: 1, 32>}, {pipeline_mode = #tpu.pipeline_mode<synchronous>, transform_indices = @transform_11, window_bounds = array<i64: 1, 1>}, {pipeline_mode = #tpu.pipeline_mode<synchronous>, transform_indices = @transform_12, window_bounds = array<i64: 32, 16>}, {pipeline_mode = #tpu.pipeline_mode<synchronous>, transform_indices = @transform_13, window_bounds = array<i64: 32, 1>}, {pipeline_mode = #tpu.pipeline_mode<synchronous>, transform_indices = @transform_14, window_bounds = array<i64: 32, 32>}, {pipeline_mode = #tpu.pipeline_mode<synchronous>, transform_indices = @transform_15, window_bounds = array<i64: 32, 1>}, {pipeline_mode = #tpu.pipeline_mode<synchronous>, transform_indices = @transform_16, window_bounds = array<i64: 1, 32>}, {pipeline_mode = #tpu.pipeline_mode<synchronous>, transform_indices = @transform_17, window_bounds = array<i64: 1, 1>}, {transform_indices = @transform_18, window_bounds = array<i64: 1, 128>}]} {
    %c0 = arith.constant 0 : index
    %c0_0 = arith.constant 0 : index
    %0 = vector.load %arg1[%c0, %c0_0] : memref<16x128xf32, #tpu.memory_space<vmem>>, vector<16x128xf32>
    %c0_1 = arith.constant 0 : index
    %c0_2 = arith.constant 0 : index
    %1 = vector.load %arg2[%c0_1, %c0_2] : memref<8x128xf32, #tpu.memory_space<vmem>>, vector<8x128xf32>
    %c0_3 = arith.constant 0 : index
    %c0_4 = arith.constant 0 : index
    %2 = vector.load %arg3[%c0_3, %c0_4] : memref<16x128xf32, #tpu.memory_space<vmem>>, vector<16x128xf32>
    %c0_5 = arith.constant 0 : index
    %c0_6 = arith.constant 0 : index
    %3 = vector.load %arg6[%c0_5, %c0_6] : memref<32x16xf32, #tpu.memory_space<vmem>>, vector<32x16xf32>
    %cst = arith.constant dense<0.000000e+00> : vector<32x128xf32>
    %4 = tpu.matmul %3, %0, %cst {dimension_numbers = #tpu.dot_dimension_numbers<[1], [0], [0], [1], [0, 0, 1, 1], [], []>} : vector<32x16xf32>, vector<16x128xf32>, vector<32x128xf32> -> vector<32x128xf32>
    %c0_7 = arith.constant 0 : index
    %c0_8 = arith.constant 0 : index
    %5 = vector.load %arg7[%c0_7, %c0_8] : memref<32x8xf32, #tpu.memory_space<vmem>>, vector<32x8xf32>
    %cst_9 = arith.constant dense<0.000000e+00> : vector<32x128xf32>
    %6 = tpu.matmul %5, %1, %cst_9 {dimension_numbers = #tpu.dot_dimension_numbers<[1], [0], [0], [1], [0, 0, 1, 1], [], []>} : vector<32x8xf32>, vector<8x128xf32>, vector<32x128xf32> -> vector<32x128xf32>
    %7 = arith.addf %4, %6 : vector<32x128xf32>
    %c0_10 = arith.constant 0 : index
    %c0_11 = arith.constant 0 : index
    %8 = vector.load %arg8[%c0_10, %c0_11] : memref<32x1xf32, #tpu.memory_space<vmem>>, vector<32x1xf32>
    %9 = vector.broadcast %8 : vector<32x1xf32> to vector<32x128xf32>
    %10 = arith.addf %7, %9 : vector<32x128xf32>
    %cst_12 = arith.constant 0.000000e+00 : f32
    %11 = vector.broadcast %cst_12 : f32 to vector<32x128xf32>
    %12 = arith.maximumf %10, %11 : vector<32x128xf32>
    %c0_13 = arith.constant 0 : index
    %c0_14 = arith.constant 0 : index
    %13 = vector.load %arg9[%c0_13, %c0_14] : memref<32x32xf32, #tpu.memory_space<vmem>>, vector<32x32xf32>
    %cst_15 = arith.constant dense<0.000000e+00> : vector<32x128xf32>
    %14 = tpu.matmul %13, %12, %cst_15 {dimension_numbers = #tpu.dot_dimension_numbers<[1], [0], [0], [1], [0, 0, 1, 1], [], []>} : vector<32x32xf32>, vector<32x128xf32>, vector<32x128xf32> -> vector<32x128xf32>
    %c0_16 = arith.constant 0 : index
    %c0_17 = arith.constant 0 : index
    %15 = vector.load %arg10[%c0_16, %c0_17] : memref<32x1xf32, #tpu.memory_space<vmem>>, vector<32x1xf32>
    %16 = vector.broadcast %15 : vector<32x1xf32> to vector<32x128xf32>
    %17 = arith.addf %14, %16 : vector<32x128xf32>
    %cst_18 = arith.constant 0.000000e+00 : f32
    %18 = vector.broadcast %cst_18 : f32 to vector<32x128xf32>
    %19 = arith.maximumf %17, %18 : vector<32x128xf32>
    %c0_19 = arith.constant 0 : index
    %c0_20 = arith.constant 0 : index
    %20 = vector.load %arg11[%c0_19, %c0_20] : memref<1x32xf32, #tpu.memory_space<vmem>>, vector<1x32xf32>
    %cst_21 = arith.constant dense<0.000000e+00> : vector<1x128xf32>
    %21 = tpu.matmul %20, %19, %cst_21 {dimension_numbers = #tpu.dot_dimension_numbers<[1], [0], [0], [1], [0, 0, 1, 1], [], []>} : vector<1x32xf32>, vector<32x128xf32>, vector<1x128xf32> -> vector<1x128xf32>
    %c0_22 = arith.constant 0 : index
    %c0_23 = arith.constant 0 : index
    %22 = vector.load %arg12[%c0_22, %c0_23] : memref<1x1xf32, #tpu.memory_space<vmem>>, vector<1x1xf32>
    %23 = vector.broadcast %22 : vector<1x1xf32> to vector<1x128xf32>
    %24 = arith.addf %21, %23 : vector<1x128xf32>
    %c0_24 = arith.constant 0 : index
    %c0_25 = arith.constant 0 : index
    %25 = vector.load %arg13[%c0_24, %c0_25] : memref<32x16xf32, #tpu.memory_space<vmem>>, vector<32x16xf32>
    %cst_26 = arith.constant dense<0.000000e+00> : vector<32x128xf32>
    %26 = tpu.matmul %25, %0, %cst_26 {dimension_numbers = #tpu.dot_dimension_numbers<[1], [0], [0], [1], [0, 0, 1, 1], [], []>} : vector<32x16xf32>, vector<16x128xf32>, vector<32x128xf32> -> vector<32x128xf32>
    %c0_27 = arith.constant 0 : index
    %c0_28 = arith.constant 0 : index
    %27 = vector.load %arg14[%c0_27, %c0_28] : memref<32x1xf32, #tpu.memory_space<vmem>>, vector<32x1xf32>
    %28 = vector.broadcast %27 : vector<32x1xf32> to vector<32x128xf32>
    %29 = arith.addf %26, %28 : vector<32x128xf32>
    %cst_29 = arith.constant 0.000000e+00 : f32
    %30 = vector.broadcast %cst_29 : f32 to vector<32x128xf32>
    %31 = arith.maximumf %29, %30 : vector<32x128xf32>
    %c0_30 = arith.constant 0 : index
    %c0_31 = arith.constant 0 : index
    %32 = vector.load %arg15[%c0_30, %c0_31] : memref<32x32xf32, #tpu.memory_space<vmem>>, vector<32x32xf32>
    %cst_32 = arith.constant dense<0.000000e+00> : vector<32x128xf32>
    %33 = tpu.matmul %32, %31, %cst_32 {dimension_numbers = #tpu.dot_dimension_numbers<[1], [0], [0], [1], [0, 0, 1, 1], [], []>} : vector<32x32xf32>, vector<32x128xf32>, vector<32x128xf32> -> vector<32x128xf32>
    %c0_33 = arith.constant 0 : index
    %c0_34 = arith.constant 0 : index
    %34 = vector.load %arg16[%c0_33, %c0_34] : memref<32x1xf32, #tpu.memory_space<vmem>>, vector<32x1xf32>
    %35 = vector.broadcast %34 : vector<32x1xf32> to vector<32x128xf32>
    %36 = arith.addf %33, %35 : vector<32x128xf32>
    %cst_35 = arith.constant 0.000000e+00 : f32
    %37 = vector.broadcast %cst_35 : f32 to vector<32x128xf32>
    %38 = arith.maximumf %36, %37 : vector<32x128xf32>
    %c0_36 = arith.constant 0 : index
    %c0_37 = arith.constant 0 : index
    %39 = vector.load %arg17[%c0_36, %c0_37] : memref<1x32xf32, #tpu.memory_space<vmem>>, vector<1x32xf32>
    %cst_38 = arith.constant dense<0.000000e+00> : vector<1x128xf32>
    %40 = tpu.matmul %39, %38, %cst_38 {dimension_numbers = #tpu.dot_dimension_numbers<[1], [0], [0], [1], [0, 0, 1, 1], [], []>} : vector<1x32xf32>, vector<32x128xf32>, vector<1x128xf32> -> vector<1x128xf32>
    %c0_39 = arith.constant 0 : index
    %c0_40 = arith.constant 0 : index
    %41 = vector.load %arg18[%c0_39, %c0_40] : memref<1x1xf32, #tpu.memory_space<vmem>>, vector<1x1xf32>
    %42 = vector.broadcast %41 : vector<1x1xf32> to vector<1x128xf32>
    %43 = arith.addf %40, %42 : vector<1x128xf32>
    %c0_41 = arith.constant 0 : index
    %c0_42 = arith.constant 0 : index
    %44 = vector.load %arg13[%c0_41, %c0_42] : memref<32x16xf32, #tpu.memory_space<vmem>>, vector<32x16xf32>
    %cst_43 = arith.constant dense<0.000000e+00> : vector<32x128xf32>
    %45 = tpu.matmul %44, %2, %cst_43 {dimension_numbers = #tpu.dot_dimension_numbers<[1], [0], [0], [1], [0, 0, 1, 1], [], []>} : vector<32x16xf32>, vector<16x128xf32>, vector<32x128xf32> -> vector<32x128xf32>
    %c0_44 = arith.constant 0 : index
    %c0_45 = arith.constant 0 : index
    %46 = vector.load %arg14[%c0_44, %c0_45] : memref<32x1xf32, #tpu.memory_space<vmem>>, vector<32x1xf32>
    %47 = vector.broadcast %46 : vector<32x1xf32> to vector<32x128xf32>
    %48 = arith.addf %45, %47 : vector<32x128xf32>
    %cst_46 = arith.constant 0.000000e+00 : f32
    %49 = vector.broadcast %cst_46 : f32 to vector<32x128xf32>
    %50 = arith.maximumf %48, %49 : vector<32x128xf32>
    %c0_47 = arith.constant 0 : index
    %c0_48 = arith.constant 0 : index
    %51 = vector.load %arg15[%c0_47, %c0_48] : memref<32x32xf32, #tpu.memory_space<vmem>>, vector<32x32xf32>
    %cst_49 = arith.constant dense<0.000000e+00> : vector<32x128xf32>
    %52 = tpu.matmul %51, %50, %cst_49 {dimension_numbers = #tpu.dot_dimension_numbers<[1], [0], [0], [1], [0, 0, 1, 1], [], []>} : vector<32x32xf32>, vector<32x128xf32>, vector<32x128xf32> -> vector<32x128xf32>
    %c0_50 = arith.constant 0 : index
    %c0_51 = arith.constant 0 : index
    %53 = vector.load %arg16[%c0_50, %c0_51] : memref<32x1xf32, #tpu.memory_space<vmem>>, vector<32x1xf32>
    %54 = vector.broadcast %53 : vector<32x1xf32> to vector<32x128xf32>
    %55 = arith.addf %52, %54 : vector<32x128xf32>
    %cst_52 = arith.constant 0.000000e+00 : f32
    %56 = vector.broadcast %cst_52 : f32 to vector<32x128xf32>
    %57 = arith.maximumf %55, %56 : vector<32x128xf32>
    %c0_53 = arith.constant 0 : index
    %c0_54 = arith.constant 0 : index
    %58 = vector.load %arg17[%c0_53, %c0_54] : memref<1x32xf32, #tpu.memory_space<vmem>>, vector<1x32xf32>
    %cst_55 = arith.constant dense<0.000000e+00> : vector<1x128xf32>
    %59 = tpu.matmul %58, %57, %cst_55 {dimension_numbers = #tpu.dot_dimension_numbers<[1], [0], [0], [1], [0, 0, 1, 1], [], []>} : vector<1x32xf32>, vector<32x128xf32>, vector<1x128xf32> -> vector<1x128xf32>
    %c0_56 = arith.constant 0 : index
    %c0_57 = arith.constant 0 : index
    %60 = vector.load %arg18[%c0_56, %c0_57] : memref<1x1xf32, #tpu.memory_space<vmem>>, vector<1x1xf32>
    %61 = vector.broadcast %60 : vector<1x1xf32> to vector<1x128xf32>
    %62 = arith.addf %59, %61 : vector<1x128xf32>
    %c0_58 = arith.constant 0 : index
    %c0_59 = arith.constant 0 : index
    %63 = vector.load %arg4[%c0_58, %c0_59] : memref<1x128xf32, #tpu.memory_space<vmem>>, vector<1x128xf32>
    %cst_60 = arith.constant 9.900000e-01 : f32
    %64 = vector.broadcast %cst_60 : f32 to vector<1x128xf32>
    %65 = arith.mulf %64, %63 : vector<1x128xf32>
    %66 = arith.mulf %65, %62 : vector<1x128xf32>
    %67 = arith.addf %24, %66 : vector<1x128xf32>
    %68 = arith.subf %67, %43 : vector<1x128xf32>
    %c0_61 = arith.constant 0 : index
    %c0_62 = arith.constant 0 : index
    %69 = vector.load %arg5[%c0_61, %c0_62] : memref<1x128xf32, #tpu.memory_space<vmem>>, vector<1x128xf32>
    %70 = arith.subf %68, %69 : vector<1x128xf32>
    %c0_63 = arith.constant 0 : index
    %c0_64 = arith.constant 0 : index
    %71 = vector.load %arg19[%c0_63, %c0_64] : memref<1x128xf32, #tpu.memory_space<vmem>>, vector<1x128xf32>
    tpu.vector_store %arg19[%c0_63, %c0_64], %70 {strides = array<i32>} : memref<1x128xf32, #tpu.memory_space<vmem>>, vector<1x128xf32>,
    return
  }
  func.func @transform_0(%arg0: i32) -> (i32, i32) {
    %c0_i32 = arith.constant 0 : i32
    %c0_i32_0 = arith.constant 0 : i32
    return %c0_i32, %arg0 : i32, i32
  }
  func.func @transform_1(%arg0: i32) -> (i32, i32) {
    %c0_i32 = arith.constant 0 : i32
    %c0_i32_0 = arith.constant 0 : i32
    return %c0_i32, %arg0 : i32, i32
  }
  func.func @transform_2(%arg0: i32) -> (i32, i32) {
    %c0_i32 = arith.constant 0 : i32
    %c0_i32_0 = arith.constant 0 : i32
    return %c0_i32, %arg0 : i32, i32
  }
  func.func @transform_3(%arg0: i32) -> (i32, i32) {
    %c0_i32 = arith.constant 0 : i32
    %c0_i32_0 = arith.constant 0 : i32
    return %c0_i32, %arg0 : i32, i32
  }
  func.func @transform_4(%arg0: i32) -> (i32, i32) {
    %c0_i32 = arith.constant 0 : i32
    %c0_i32_0 = arith.constant 0 : i32
    return %c0_i32, %arg0 : i32, i32
  }
  func.func @transform_5(%arg0: i32) -> (i32, i32) {
    %c0_i32 = arith.constant 0 : i32
    %c0_i32_0 = arith.constant 0 : i32
    %c0_i32_1 = arith.constant 0 : i32
    return %c0_i32, %c0_i32_0 : i32, i32
  }
  func.func @transform_6(%arg0: i32) -> (i32, i32) {
    %c0_i32 = arith.constant 0 : i32
    %c0_i32_0 = arith.constant 0 : i32
    %c0_i32_1 = arith.constant 0 : i32
    return %c0_i32, %c0_i32_0 : i32, i32
  }
  func.func @transform_7(%arg0: i32) -> (i32, i32) {
    %c0_i32 = arith.constant 0 : i32
    %c0_i32_0 = arith.constant 0 : i32
    %c0_i32_1 = arith.constant 0 : i32
    return %c0_i32, %c0_i32_0 : i32, i32
  }
  func.func @transform_8(%arg0: i32) -> (i32, i32) {
    %c0_i32 = arith.constant 0 : i32
    %c0_i32_0 = arith.constant 0 : i32
    %c0_i32_1 = arith.constant 0 : i32
    return %c0_i32, %c0_i32_0 : i32, i32
  }
  func.func @transform_9(%arg0: i32) -> (i32, i32) {
    %c0_i32 = arith.constant 0 : i32
    %c0_i32_0 = arith.constant 0 : i32
    %c0_i32_1 = arith.constant 0 : i32
    return %c0_i32, %c0_i32_0 : i32, i32
  }
  func.func @transform_10(%arg0: i32) -> (i32, i32) {
    %c0_i32 = arith.constant 0 : i32
    %c0_i32_0 = arith.constant 0 : i32
    %c0_i32_1 = arith.constant 0 : i32
    return %c0_i32, %c0_i32_0 : i32, i32
  }
  func.func @transform_11(%arg0: i32) -> (i32, i32) {
    %c0_i32 = arith.constant 0 : i32
    %c0_i32_0 = arith.constant 0 : i32
    %c0_i32_1 = arith.constant 0 : i32
    return %c0_i32, %c0_i32_0 : i32, i32
  }
  func.func @transform_12(%arg0: i32) -> (i32, i32) {
    %c0_i32 = arith.constant 0 : i32
    %c0_i32_0 = arith.constant 0 : i32
    %c0_i32_1 = arith.constant 0 : i32
    return %c0_i32, %c0_i32_0 : i32, i32
  }
  func.func @transform_13(%arg0: i32) -> (i32, i32) {
    %c0_i32 = arith.constant 0 : i32
    %c0_i32_0 = arith.constant 0 : i32
    %c0_i32_1 = arith.constant 0 : i32
    return %c0_i32, %c0_i32_0 : i32, i32
  }
  func.func @transform_14(%arg0: i32) -> (i32, i32) {
    %c0_i32 = arith.constant 0 : i32
    %c0_i32_0 = arith.constant 0 : i32
    %c0_i32_1 = arith.constant 0 : i32
    return %c0_i32, %c0_i32_0 : i32, i32
  }
  func.func @transform_15(%arg0: i32) -> (i32, i32) {
    %c0_i32 = arith.constant 0 : i32
    %c0_i32_0 = arith.constant 0 : i32
    %c0_i32_1 = arith.constant 0 : i32
    return %c0_i32, %c0_i32_0 : i32, i32
  }
  func.func @transform_16(%arg0: i32) -> (i32, i32) {
    %c0_i32 = arith.constant 0 : i32
    %c0_i32_0 = arith.constant 0 : i32
    %c0_i32_1 = arith.constant 0 : i32
    return %c0_i32, %c0_i32_0 : i32, i32
  }
  func.func @transform_17(%arg0: i32) -> (i32, i32) {
    %c0_i32 = arith.constant 0 : i32
    %c0_i32_0 = arith.constant 0 : i32
    %c0_i32_1 = arith.constant 0 : i32
    return %c0_i32, %c0_i32_0 : i32, i32
  }
  func.func @transform_18(%arg0: i32) -> (i32, i32) {
    %c0_i32 = arith.constant 0 : i32
    %c0_i32_0 = arith.constant 0 : i32
    return %c0_i32, %arg0 : i32, i32
  }
}

</mosaic_0001>

<llo_original>
// kernel: tpu_custom_call.1
$region0: #{tpu_custom_call.1}
  #allocation0 [shape = 'u32[]', space=smem, size = 0x4, offset = 0x4, fixed_abs, tag = 'smem constant byte address 0x4 - core index']
  #allocation1 [shape = 'u32[144,128]{1,0:T(1,128)}', space=vmem, size = 0x12000, scoped, tag = 'internal scratch']
  #allocation2 [shape = 'f32[1,1]{1,0:T(1,128)S(1)}', space=vmem, size = 0x200, scoped, tag = 'scoped memory for tpu_custom_call.1']
  #allocation3 [shape = 'f32[1,1]{1,0:T(1,128)S(1)}', space=vmem, size = 0x200, scoped, tag = 'scoped memory for tpu_custom_call.1']
  %s0 = inlined_call_operand.vmem [shape: f32[16,8], index: 0, kind: input, shape index: {}]
  %s1 = inlined_call_operand.vmem [shape: f32[8,8], index: 1, kind: input, shape index: {}]
  %s2 = inlined_call_operand.vmem [shape: f32[16,8], index: 2, kind: input, shape index: {}]
  %s3 = inlined_call_operand.vmem [shape: f32[1,8], index: 3, kind: input, shape index: {}]
  %s4 = inlined_call_operand.vmem [shape: f32[1,8], index: 4, kind: input, shape index: {}]
  %s5 = inlined_call_operand.vmem [shape: f32[32,16], index: 5, kind: input, shape index: {}]
  %s6 = inlined_call_operand.vmem [shape: f32[32,8], index: 6, kind: input, shape index: {}]
  %s7 = inlined_call_operand.vmem [shape: f32[32,1], index: 7, kind: input, shape index: {}]
  %s8 = inlined_call_operand.vmem [shape: f32[32,32], index: 8, kind: input, shape index: {}]
  %s9 = inlined_call_operand.vmem [shape: f32[32,1], index: 9, kind: input, shape index: {}]
  %s10 = inlined_call_operand.vmem [shape: f32[1,32], index: 10, kind: input, shape index: {}]
  %s11 = inlined_call_operand.<no memory space> [shape: f32[1,1], index: 11, kind: input, shape index: {}]
  %s12 = inlined_call_operand.vmem [shape: f32[32,16], index: 12, kind: input, shape index: {}]
  %s13 = inlined_call_operand.vmem [shape: f32[32,1], index: 13, kind: input, shape index: {}]
  %s14 = inlined_call_operand.vmem [shape: f32[32,32], index: 14, kind: input, shape index: {}]
  %s15 = inlined_call_operand.vmem [shape: f32[32,1], index: 15, kind: input, shape index: {}]
  %s16 = inlined_call_operand.vmem [shape: f32[1,32], index: 16, kind: input, shape index: {}]
  %s17 = inlined_call_operand.<no memory space> [shape: f32[1,1], index: 17, kind: input, shape index: {}]
  %s18 = inlined_call_operand.hbm [shape: f32[1,8], index: 18, kind: output, shape index: {}]
  %s19 = sld [smem:[#allocation0]]
  $region82: #{tpu_custom_call.1} parent=0
    _
  %s21 = ssub.s32 1, %s19
  %s22 = scalar_select 0, %s21, %s19
  %v23 = vstv %s11
  %24 = vst [vmem:[#allocation2] sm:$0x1] %v23
  %v25 = vstv %s17
  %26 = vst [vmem:[#allocation3] sm:$0x1] %v25
  $region1: #{tpu_custom_call.1} parent=0
    #allocation4 [shape = 'u8[512]{0}', space=vmem, size = 0x400, scoped, tag = 'output window, operand 0, single buffered']
    #allocation5 [shape = 's32[1]{0}', space=sflag, size = 0x4, scoped, tag = 'scoped memory for tpu_custom_call.1']
    %27 = vsyncpa [#allocation5], 0
    // Predicated region
    $region2: #{tpu_custom_call.1} parent=1 // pred_check
      _
    $region3: #{tpu_custom_call.1} parent=1 // pred_check_branch
      %29 = sbr.rel (0) target = $region5
    $region4: #{tpu_custom_call.1} parent=1 // pred_region
      _
    $region5: #{tpu_custom_call.1} parent=1 // pred_fallthru
      _
    // Predicated region
    $region6: #{tpu_custom_call.1} parent=1 // pred_check
      _
    $region7: #{tpu_custom_call.1} parent=1 // pred_check_branch
      %31 = sbr.rel (0) target = $region9
    $region8: #{tpu_custom_call.1} parent=1 // pred_region
      _
    $region9: #{tpu_custom_call.1} parent=1 // pred_fallthru
      _
    // Predicated region
    $region10: #{tpu_custom_call.1} parent=1 // pred_check
      _
    $region11: #{tpu_custom_call.1} parent=1 // pred_check_branch
      %33 = sbr.rel (0) target = $region13
    $region12: #{tpu_custom_call.1} parent=1 // pred_region
      _
    $region13: #{tpu_custom_call.1} parent=1 // pred_fallthru
      _
    // Predicated region
    $region14: #{tpu_custom_call.1} parent=1 // pred_check
      _
    $region15: #{tpu_custom_call.1} parent=1 // pred_check_branch
      %35 = sbr.rel (0) target = $region17
    $region16: #{tpu_custom_call.1} parent=1 // pred_region
      _
    $region17: #{tpu_custom_call.1} parent=1 // pred_fallthru
      _
    // Predicated region
    $region18: #{tpu_custom_call.1} parent=1 // pred_check
      _
    $region19: #{tpu_custom_call.1} parent=1 // pred_check_branch
      %37 = sbr.rel (0) target = $region21
    $region20: #{tpu_custom_call.1} parent=1 // pred_region
      _
    $region21: #{tpu_custom_call.1} parent=1 // pred_fallthru
      _
    // Predicated region
    $region22: #{tpu_custom_call.1} parent=1 // pred_check
      _
    $region23: #{tpu_custom_call.1} parent=1 // pred_check_branch
      %39 = sbr.rel (0) target = $region25
    $region24: #{tpu_custom_call.1} parent=1 // pred_region
      _
    $region25: #{tpu_custom_call.1} parent=1 // pred_fallthru
      _
    // Predicated region
    $region26: #{tpu_custom_call.1} parent=1 // pred_check
      _
    $region27: #{tpu_custom_call.1} parent=1 // pred_check_branch
      %41 = sbr.rel (0) target = $region29
    $region28: #{tpu_custom_call.1} parent=1 // pred_region
      _
    $region29: #{tpu_custom_call.1} parent=1 // pred_fallthru
      _
    // Predicated region
    $region30: #{tpu_custom_call.1} parent=1 // pred_check
      _
    $region31: #{tpu_custom_call.1} parent=1 // pred_check_branch
      %43 = sbr.rel (0) target = $region33
    $region32: #{tpu_custom_call.1} parent=1 // pred_region
      _
    $region33: #{tpu_custom_call.1} parent=1 // pred_fallthru
      _
    // Predicated region
    $region34: #{tpu_custom_call.1} parent=1 // pred_check
      _
    $region35: #{tpu_custom_call.1} parent=1 // pred_check_branch
      %45 = sbr.rel (0) target = $region37
    $region36: #{tpu_custom_call.1} parent=1 // pred_region
      _
    $region37: #{tpu_custom_call.1} parent=1 // pred_fallthru
      _
    // Predicated region
    $region38: #{tpu_custom_call.1} parent=1 // pred_check
      _
    $region39: #{tpu_custom_call.1} parent=1 // pred_check_branch
      %47 = sbr.rel (0) target = $region41
    $region40: #{tpu_custom_call.1} parent=1 // pred_region
      _
    $region41: #{tpu_custom_call.1} parent=1 // pred_fallthru
      _
    // Predicated region
    $region42: #{tpu_custom_call.1} parent=1 // pred_check
      _
    $region43: #{tpu_custom_call.1} parent=1 // pred_check_branch
      %49 = sbr.rel (0) target = $region45
    $region44: #{tpu_custom_call.1} parent=1 // pred_region
      _
    $region45: #{tpu_custom_call.1} parent=1 // pred_fallthru
      _
    // Predicated region
    $region46: #{tpu_custom_call.1} parent=1 // pred_check
      _
    $region47: #{tpu_custom_call.1} parent=1 // pred_check_branch
      %51 = sbr.rel (0) target = $region49
    $region48: #{tpu_custom_call.1} parent=1 // pred_region
      _
    $region49: #{tpu_custom_call.1} parent=1 // pred_fallthru
      _
    // Predicated region
    $region50: #{tpu_custom_call.1} parent=1 // pred_check
      _
    $region51: #{tpu_custom_call.1} parent=1 // pred_check_branch
      %53 = sbr.rel (0) target = $region53
    $region52: #{tpu_custom_call.1} parent=1 // pred_region
      _
    $region53: #{tpu_custom_call.1} parent=1 // pred_fallthru
      _
    // Predicated region
    $region54: #{tpu_custom_call.1} parent=1 // pred_check
      _
    $region55: #{tpu_custom_call.1} parent=1 // pred_check_branch
      %55 = sbr.rel (0) target = $region57
    $region56: #{tpu_custom_call.1} parent=1 // pred_region
      _
    $region57: #{tpu_custom_call.1} parent=1 // pred_fallthru
      _
    // Predicated region
    $region58: #{tpu_custom_call.1} parent=1 // pred_check
      _
    $region59: #{tpu_custom_call.1} parent=1 // pred_check_branch
      %57 = sbr.rel (0) target = $region61
    $region60: #{tpu_custom_call.1} parent=1 // pred_region
      _
    $region61: #{tpu_custom_call.1} parent=1 // pred_fallthru
      _
    // Predicated region
    $region62: #{tpu_custom_call.1} parent=1 // pred_check
      _
    $region63: #{tpu_custom_call.1} parent=1 // pred_check_branch
      %59 = sbr.rel (0) target = $region65
    $region64: #{tpu_custom_call.1} parent=1 // pred_region
      _
    $region65: #{tpu_custom_call.1} parent=1 // pred_fallthru
      _
    // Predicated region
    $region66: #{tpu_custom_call.1} parent=1 // pred_check
      _
    $region67: #{tpu_custom_call.1} parent=1 // pred_check_branch
      %61 = sbr.rel (0) target = $region69
    $region68: #{tpu_custom_call.1} parent=1 // pred_region
      _
    $region69: #{tpu_custom_call.1} parent=1 // pred_fallthru
      _
    // Predicated region
    $region70: #{tpu_custom_call.1} parent=1 // pred_check
      _
    $region71: #{tpu_custom_call.1} parent=1 // pred_check_branch
      %63 = sbr.rel (0) target = $region73
    $region72: #{tpu_custom_call.1} parent=1 // pred_region
      _
    $region73: #{tpu_custom_call.1} parent=1 // pred_fallthru
      _
    %v64 = vld [vmem:[%s0] sm:$0xff]
    %v65 = vld [vmem:[%s0 + $0x8] sm:$0xff]
    %v66 = vld [vmem:[%s1] sm:$0xff]
    %v67 = vld [vmem:[%s2] sm:$0xff]
    %v68 = vld [vmem:[%s2 + $0x8] sm:$0xff]
    %v69 = vld [vmem:[%s5] sm:$0xff]
    %v70 = vld [vmem:[%s5 + $0x8] sm:$0xff]
    %v71 = vld [vmem:[%s5 + $0x10] sm:$0xff]
    %v72 = vld [vmem:[%s5 + $0x18] sm:$0xff]
    %v73 = vld [vmem:[%s6] sm:$0xff]
    %v74 = vld [vmem:[%s6 + $0x8] sm:$0xff]
    %v75 = vld [vmem:[%s6 + $0x10] sm:$0xff]
    %v76 = vld [vmem:[%s6 + $0x18] sm:$0xff]
    %vm77 = vcmask 64512
    %v79 = vsel %vm77, %v73, 0
    %v82 = vsel %vm77, %v74, 0
    %v85 = vsel %vm77, %v75, 0
    %v88 = vsel %vm77, %v76, 0
    %90 = vmatprep.subr.mxu0 0.0
    %91 = vmatpush1.msra.mxu0 %v66
    %92 = vmatprep.subr.mxu0 0.0
    %93 = vmatpush1.msra.mxu0 0.0
    %94 = vmatprep.subr.mxu0 0.0
    %95 = vmatpush1.msra.mxu0 0.0
    %96 = vmatprep.subr.mxu0 0.0
    %97 = vmatpush1.msra.mxu0 0.0
    %98 = vmatprep.subr.mxu0 0.0
    %99 = vmatpush1.msra.mxu0 0.0
    %100 = vmatprep.subr.mxu0 0.0
    %101 = vmatpush1.msra.mxu0 0.0
    %102 = vmatprep.subr.mxu0 0.0
    %103 = vmatpush1.msra.mxu0 0.0
    %104 = vmatprep.subr.mxu0 0.0
    %105 = vmatpush1.msra.mxu0 0.0
    %106 = vmatprep.subr.mxu0 0.0
    %107 = vmatpush1.msra.mxu0 0.0
    %108 = vmatprep.subr.mxu0 0.0
    %109 = vmatpush1.msra.mxu0 0.0
    %110 = vmatprep.subr.mxu0 0.0
    %111 = vmatpush1.msra.mxu0 0.0
    %112 = vmatprep.subr.mxu0 0.0
    %113 = vmatpush1.msra.mxu0 0.0
    %114 = vmatprep.subr.mxu0 0.0
    %115 = vmatpush1.msra.mxu0 0.0
    %116 = vmatprep.subr.mxu0 0.0
    %117 = vmatpush1.msra.mxu0 0.0
    %118 = vmatprep.subr.mxu0 0.0
    %119 = vmatpush1.msra.mxu0 0.0
    %120 = vmatprep.subr.mxu0 0.0
    %121 = vmatpush1.msra.mxu0 0.0
    %122 = vmatprep.subr.mxu0 0.0
    %123 = vmatpush1.msra.mxu0 0.0
    %124 = vmatprep.subr.mxu0 0.0
    %125 = vmatpush1.msra.mxu0 0.0
    %126 = vmatprep.subr.mxu0 0.0
    %127 = vmatpush1.msra.mxu0 0.0
    %128 = vmatprep.subr.mxu0 0.0
    %129 = vmatpush1.msra.mxu0 0.0
    %130 = vmatprep.subr.mxu0 0.0
    %131 = vmatpush1.msra.mxu0 0.0
    %132 = vmatprep.subr.mxu0 0.0
    %133 = vmatpush1.msra.mxu0 0.0
    %134 = vmatprep.subr.mxu0 0.0
    %135 = vmatpush1.msra.mxu0 0.0
    %136 = vmatprep.subr.mxu0 0.0
    %137 = vmatpush1.msra.mxu0 0.0
    %138 = vmatprep.subr.mxu0 0.0
    %139 = vmatpush1.msra.mxu0 0.0
    %140 = vmatprep.subr.mxu0 0.0
    %141 = vmatpush1.msra.mxu0 0.0
    %142 = vmatprep.subr.mxu0 0.0
    %143 = vmatpush1.msra.mxu0 0.0
    %144 = vmatprep.subr.mxu0 0.0
    %145 = vmatpush1.msra.mxu0 0.0
    %146 = vmatprep.subr.mxu0 0.0
    %147 = vmatpush1.msra.mxu0 0.0
    %148 = vmatprep.subr.mxu0 0.0
    %149 = vmatpush1.msra.mxu0 0.0
    %150 = vmatprep.subr.mxu0 0.0
    %151 = vmatpush1.msra.mxu0 0.0
    %152 = vmatprep.subr.mxu0 0.0
    %153 = vmatpush1.msra.mxu0 0.0
    %154 = vmatprep.mubr.f32.mxu0 0.0
    %155 = vmatmul.mubr.f32.gmra.mrb[0].mxu0 %v79
    %v156 = vpop.f32.mrb[0].mxu0
    %v157 = vadd.f32 0.0, %v156
    %v158 = vpop.f32.mrb[0].mxu0
    %159 = vmatprep.mubr.f32.mxu0 0.0
    %160 = vmatmul.mubr.f32.gmra.mrb[0].mxu0 %v82
    %v161 = vpop.f32.mrb[0].mxu0
    %v162 = vadd.f32 0.0, %v161
    %v163 = vpop.f32.mrb[0].mxu0
    %164 = vmatprep.mubr.f32.mxu0 0.0
    %165 = vmatmul.mubr.f32.gmra.mrb[0].mxu0 %v85
    %v166 = vpop.f32.mrb[0].mxu0
    %v167 = vadd.f32 0.0, %v166
    %v168 = vpop.f32.mrb[0].mxu0
    %169 = vmatprep.mubr.f32.mxu0 0.0
    %170 = vmatmul.mubr.f32.gmra.mrb[0].mxu0 %v88
    %v171 = vpop.f32.mrb[0].mxu0
    %v172 = vadd.f32 0.0, %v171
    %v173 = vpop.f32.mrb[0].mxu0
    %174 = vdwg.mxu0
    %vm175 = vcmask 130048
    %v177 = vsel %vm175, %v69, 0
    %v180 = vsel %vm175, %v70, 0
    %v183 = vsel %vm175, %v71, 0
    %v186 = vsel %vm175, %v72, 0
    %188 = vmatprep.subr.mxu0 0.0
    %189 = vmatpush1.msra.mxu0 %v64
    %190 = vmatprep.subr.mxu0 0.0
    %191 = vmatpush1.msra.mxu0 %v65
    %192 = vmatprep.subr.mxu0 0.0
    %193 = vmatpush1.msra.mxu0 0.0
    %194 = vmatprep.subr.mxu0 0.0
    %195 = vmatpush1.msra.mxu0 0.0
    %196 = vmatprep.subr.mxu0 0.0
    %197 = vmatpush1.msra.mxu0 0.0
    %198 = vmatprep.subr.mxu0 0.0
    %199 = vmatpush1.msra.mxu0 0.0
    %200 = vmatprep.subr.mxu0 0.0
    %201 = vmatpush1.msra.mxu0 0.0
    %202 = vmatprep.subr.mxu0 0.0
    %203 = vmatpush1.msra.mxu0 0.0
    %204 = vmatprep.subr.mxu0 0.0
    %205 = vmatpush1.msra.mxu0 0.0
    %206 = vmatprep.subr.mxu0 0.0
    %207 = vmatpush1.msra.mxu0 0.0
    %208 = vmatprep.subr.mxu0 0.0
    %209 = vmatpush1.msra.mxu0 0.0
    %210 = vmatprep.subr.mxu0 0.0
    %211 = vmatpush1.msra.mxu0 0.0
    %212 = vmatprep.subr.mxu0 0.0
    %213 = vmatpush1.msra.mxu0 0.0
    %214 = vmatprep.subr.mxu0 0.0
    %215 = vmatpush1.msra.mxu0 0.0
    %216 = vmatprep.subr.mxu0 0.0
    %217 = vmatpush1.msra.mxu0 0.0
    %218 = vmatprep.subr.mxu0 0.0
    %219 = vmatpush1.msra.mxu0 0.0
    %220 = vmatprep.subr.mxu0 0.0
    %221 = vmatpush1.msra.mxu0 0.0
    %222 = vmatprep.subr.mxu0 0.0
    %223 = vmatpush1.msra.mxu0 0.0
    %224 = vmatprep.subr.mxu0 0.0
    %225 = vmatpush1.msra.mxu0 0.0
    %226 = vmatprep.subr.mxu0 0.0
    %227 = vmatpush1.msra.mxu0 0.0
    %228 = vmatprep.subr.mxu0 0.0
    %229 = vmatpush1.msra.mxu0 0.0
    %230 = vmatprep.subr.mxu0 0.0
    %231 = vmatpush1.msra.mxu0 0.0
    %232 = vmatprep.subr.mxu0 0.0
    %233 = vmatpush1.msra.mxu0 0.0
    %234 = vmatprep.subr.mxu0 0.0
    %235 = vmatpush1.msra.mxu0 0.0
    %236 = vmatprep.subr.mxu0 0.0
    %237 = vmatpush1.msra.mxu0 0.0
    %238 = vmatprep.subr.mxu0 0.0
    %239 = vmatpush1.msra.mxu0 0.0
    %240 = vmatprep.subr.mxu0 0.0
    %241 = vmatpush1.msra.mxu0 0.0
    %242 = vmatprep.subr.mxu0 0.0
    %243 = vmatpush1.msra.mxu0 0.0
    %244 = vmatprep.subr.mxu0 0.0
    %245 = vmatpush1.msra.mxu0 0.0
    %246 = vmatprep.subr.mxu0 0.0
    %247 = vmatpush1.msra.mxu0 0.0
    %248 = vmatprep.subr.mxu0 0.0
    %249 = vmatpush1.msra.mxu0 0.0
    %250 = vmatprep.subr.mxu0 0.0
    %251 = vmatpush1.msra.mxu0 0.0
    %252 = vmatprep.mubr.f32.mxu0 0.0
    %253 = vmatmul.mubr.f32.gmra.mrb[0].mxu0 %v177
    %v254 = vpop.f32.mrb[0].mxu0
    %v255 = vadd.f32 %v157, %v254
    %v256 = vpop.f32.mrb[0].mxu0
    %257 = vmatprep.mubr.f32.mxu0 0.0
    %258 = vmatmul.mubr.f32.gmra.mrb[0].mxu0 %v180
    %v259 = vpop.f32.mrb[0].mxu0
    %v260 = vadd.f32 %v162, %v259
    %v261 = vpop.f32.mrb[0].mxu0
    %262 = vmatprep.mubr.f32.mxu0 0.0
    %263 = vmatmul.mubr.f32.gmra.mrb[0].mxu0 %v183
    %v264 = vpop.f32.mrb[0].mxu0
    %v265 = vadd.f32 %v167, %v264
    %v266 = vpop.f32.mrb[0].mxu0
    %267 = vmatprep.mubr.f32.mxu0 0.0
    %268 = vmatmul.mubr.f32.gmra.mrb[0].mxu0 %v186
    %v269 = vpop.f32.mrb[0].mxu0
    %v270 = vadd.f32 %v172, %v269
    %v271 = vpop.f32.mrb[0].mxu0
    %272 = vdwg.mxu0
    %v273 = vld [vmem:[%s7] sm:$0xff]
    %v274 = vld [vmem:[%s7 + $0x8] sm:$0xff]
    %v275 = vld [vmem:[%s7 + $0x10] sm:$0xff]
    %v276 = vld [vmem:[%s7 + $0x18] sm:$0xff]
    %278 = vset.pattern.permute.xlu0 0
    %279 = vperm.xlu0 %278, %v273
    %v280 = vpop.permute.xlu0 %279
    %283 = vset.pattern.permute.xlu0 0
    %284 = vperm.xlu0 %283, %v274
    %v285 = vpop.permute.xlu0 %284
    %288 = vset.pattern.permute.xlu0 0
    %289 = vperm.xlu0 %288, %v275
    %v290 = vpop.permute.xlu0 %289
    %293 = vset.pattern.permute.xlu0 0
    %294 = vperm.xlu0 %293, %v276
    %v295 = vpop.permute.xlu0 %294
    %v297 = vadd.f32 %v255, %v280
    %v298 = vadd.f32 %v260, %v285
    %v299 = vadd.f32 %v265, %v290
    %v300 = vadd.f32 %v270, %v295
    %v301 = vmax.f32 %v297, 0.0
    %v302 = vmax.f32 %v298, 0.0
    %v303 = vmax.f32 %v299, 0.0
    %v304 = vmax.f32 %v300, 0.0
    %v305 = vld [vmem:[%s8] sm:$0xff]
    %v306 = vld [vmem:[%s8 + $0x8] sm:$0xff]
    %v307 = vld [vmem:[%s8 + $0x10] sm:$0xff]
    %v308 = vld [vmem:[%s8 + $0x18] sm:$0xff]
    %v309 = vld [vmem:[%s9] sm:$0xff]
    %v310 = vld [vmem:[%s9 + $0x8] sm:$0xff]
    %v311 = vld [vmem:[%s9 + $0x10] sm:$0xff]
    %v312 = vld [vmem:[%s9 + $0x18] sm:$0xff]
    %314 = vset.pattern.permute.xlu0 0
    %315 = vperm.xlu0 %314, %v309
    %v316 = vpop.permute.xlu0 %315
    %319 = vset.pattern.permute.xlu0 0
    %320 = vperm.xlu0 %319, %v310
    %v321 = vpop.permute.xlu0 %320
    %324 = vset.pattern.permute.xlu0 0
    %325 = vperm.xlu0 %324, %v311
    %v326 = vpop.permute.xlu0 %325
    %329 = vset.pattern.permute.xlu0 0
    %330 = vperm.xlu0 %329, %v312
    %v331 = vpop.permute.xlu0 %330
    %vm333 = vcmask 261120
    %v335 = vsel %vm333, %v305, 0
    %v338 = vsel %vm333, %v306, 0
    %v341 = vsel %vm333, %v307, 0
    %v344 = vsel %vm333, %v308, 0
    %346 = vmatprep.subr.mxu0 0.0
    %347 = vmatpush1.msra.mxu0 %v301
    %348 = vmatprep.subr.mxu0 0.0
    %349 = vmatpush1.msra.mxu0 %v302
    %350 = vmatprep.subr.mxu0 0.0
    %351 = vmatpush1.msra.mxu0 %v303
    %352 = vmatprep.subr.mxu0 0.0
    %353 = vmatpush1.msra.mxu0 %v304
    %354 = vmatprep.subr.mxu0 0.0
    %355 = vmatpush1.msra.mxu0 0.0
    %356 = vmatprep.subr.mxu0 0.0
    %357 = vmatpush1.msra.mxu0 0.0
    %358 = vmatprep.subr.mxu0 0.0
    %359 = vmatpush1.msra.mxu0 0.0
    %360 = vmatprep.subr.mxu0 0.0
    %361 = vmatpush1.msra.mxu0 0.0
    %362 = vmatprep.subr.mxu0 0.0
    %363 = vmatpush1.msra.mxu0 0.0
    %364 = vmatprep.subr.mxu0 0.0
    %365 = vmatpush1.msra.mxu0 0.0
    %366 = vmatprep.subr.mxu0 0.0
    %367 = vmatpush1.msra.mxu0 0.0
    %368 = vmatprep.subr.mxu0 0.0
    %369 = vmatpush1.msra.mxu0 0.0
    %370 = vmatprep.subr.mxu0 0.0
    %371 = vmatpush1.msra.mxu0 0.0
    %372 = vmatprep.subr.mxu0 0.0
    %373 = vmatpush1.msra.mxu0 0.0
    %374 = vmatprep.subr.mxu0 0.0
    %375 = vmatpush1.msra.mxu0 0.0
    %376 = vmatprep.subr.mxu0 0.0
    %377 = vmatpush1.msra.mxu0 0.0
    %378 = vmatprep.subr.mxu0 0.0
    %379 = vmatpush1.msra.mxu0 0.0
    %380 = vmatprep.subr.mxu0 0.0
    %381 = vmatpush1.msra.mxu0 0.0
    %382 = vmatprep.subr.mxu0 0.0
    %383 = vmatpush1.msra.mxu0 0.0
    %384 = vmatprep.subr.mxu0 0.0
    %385 = vmatpush1.msra.mxu0 0.0
    %386 = vmatprep.subr.mxu0 0.0
    %387 = vmatpush1.msra.mxu0 0.0
    %388 = vmatprep.subr.mxu0 0.0
    %389 = vmatpush1.msra.mxu0 0.0
    %390 = vmatprep.subr.mxu0 0.0
    %391 = vmatpush1.msra.mxu0 0.0
    %392 = vmatprep.subr.mxu0 0.0
    %393 = vmatpush1.msra.mxu0 0.0
    %394 = vmatprep.subr.mxu0 0.0
    %395 = vmatpush1.msra.mxu0 0.0
    %396 = vmatprep.subr.mxu0 0.0
    %397 = vmatpush1.msra.mxu0 0.0
    %398 = vmatprep.subr.mxu0 0.0
    %399 = vmatpush1.msra.mxu0 0.0
    %400 = vmatprep.subr.mxu0 0.0
    %401 = vmatpush1.msra.mxu0 0.0
    %402 = vmatprep.subr.mxu0 0.0
    %403 = vmatpush1.msra.mxu0 0.0
    %404 = vmatprep.subr.mxu0 0.0
    %405 = vmatpush1.msra.mxu0 0.0
    %406 = vmatprep.subr.mxu0 0.0
    %407 = vmatpush1.msra.mxu0 0.0
    %408 = vmatprep.subr.mxu0 0.0
    %409 = vmatpush1.msra.mxu0 0.0
    %410 = vmatprep.mubr.f32.mxu0 0.0
    %411 = vmatmul.mubr.f32.gmra.mrb[0].mxu0 %v335
    %v412 = vpop.f32.mrb[0].mxu0
    %v413 = vadd.f32 %v316, %v412
    %v414 = vpop.f32.mrb[0].mxu0
    %415 = vmatprep.mubr.f32.mxu0 0.0
    %416 = vmatmul.mubr.f32.gmra.mrb[0].mxu0 %v338
    %v417 = vpop.f32.mrb[0].mxu0
    %v418 = vadd.f32 %v321, %v417
    %v419 = vpop.f32.mrb[0].mxu0
    %420 = vmatprep.mubr.f32.mxu0 0.0
    %421 = vmatmul.mubr.f32.gmra.mrb[0].mxu0 %v341
    %v422 = vpop.f32.mrb[0].mxu0
    %v423 = vadd.f32 %v326, %v422
    %v424 = vpop.f32.mrb[0].mxu0
    %425 = vmatprep.mubr.f32.mxu0 0.0
    %426 = vmatmul.mubr.f32.gmra.mrb[0].mxu0 %v344
    %v427 = vpop.f32.mrb[0].mxu0
    %v428 = vadd.f32 %v331, %v427
    %v429 = vpop.f32.mrb[0].mxu0
    %430 = vdwg.mxu0
    %v431 = vmax.f32 %v413, 0.0
    %v432 = vmax.f32 %v418, 0.0
    %v433 = vmax.f32 %v423, 0.0
    %v434 = vmax.f32 %v428, 0.0
    %v435 = vld [vmem:[%s10] sm:$0x1]
    %v436 = vld [vmem:[#allocation2] sm:$0x1]
    %438 = vset.pattern.permute.xlu0 0
    %439 = vperm.xlu0 %438, %v436
    %v440 = vpop.permute.xlu0 %439
    %v442 = vlaneseq
    %v443 = vshrl.u32 %v442, 7
    %v444 = vsub.s32 0, %v443
    %v445 = vrot.slane %v440, %v444
    %v447 = vsel %vm333, %v435, 0
    %449 = vmatprep.subr.mxu0 0.0
    %450 = vmatpush1.msra.mxu0 %v431
    %451 = vmatprep.subr.mxu0 0.0
    %452 = vmatpush1.msra.mxu0 %v432
    %453 = vmatprep.subr.mxu0 0.0
    %454 = vmatpush1.msra.mxu0 %v433
    %455 = vmatprep.subr.mxu0 0.0
    %456 = vmatpush1.msra.mxu0 %v434
    %457 = vmatprep.subr.mxu0 0.0
    %458 = vmatpush1.msra.mxu0 0.0
    %459 = vmatprep.subr.mxu0 0.0
    %460 = vmatpush1.msra.mxu0 0.0
    %461 = vmatprep.subr.mxu0 0.0
    %462 = vmatpush1.msra.mxu0 0.0
    %463 = vmatprep.subr.mxu0 0.0
    %464 = vmatpush1.msra.mxu0 0.0
    %465 = vmatprep.subr.mxu0 0.0
    %466 = vmatpush1.msra.mxu0 0.0
    %467 = vmatprep.subr.mxu0 0.0
    %468 = vmatpush1.msra.mxu0 0.0
    %469 = vmatprep.subr.mxu0 0.0
    %470 = vmatpush1.msra.mxu0 0.0
    %471 = vmatprep.subr.mxu0 0.0
    %472 = vmatpush1.msra.mxu0 0.0
    %473 = vmatprep.subr.mxu0 0.0
    %474 = vmatpush1.msra.mxu0 0.0
    %475 = vmatprep.subr.mxu0 0.0
    %476 = vmatpush1.msra.mxu0 0.0
    %477 = vmatprep.subr.mxu0 0.0
    %478 = vmatpush1.msra.mxu0 0.0
    %479 = vmatprep.subr.mxu0 0.0
    %480 = vmatpush1.msra.mxu0 0.0
    %481 = vmatprep.subr.mxu0 0.0
    %482 = vmatpush1.msra.mxu0 0.0
    %483 = vmatprep.subr.mxu0 0.0
    %484 = vmatpush1.msra.mxu0 0.0
    %485 = vmatprep.subr.mxu0 0.0
    %486 = vmatpush1.msra.mxu0 0.0
    %487 = vmatprep.subr.mxu0 0.0
    %488 = vmatpush1.msra.mxu0 0.0
    %489 = vmatprep.subr.mxu0 0.0
    %490 = vmatpush1.msra.mxu0 0.0
    %491 = vmatprep.subr.mxu0 0.0
    %492 = vmatpush1.msra.mxu0 0.0
    %493 = vmatprep.subr.mxu0 0.0
    %494 = vmatpush1.msra.mxu0 0.0
    %495 = vmatprep.subr.mxu0 0.0
    %496 = vmatpush1.msra.mxu0 0.0
    %497 = vmatprep.subr.mxu0 0.0
    %498 = vmatpush1.msra.mxu0 0.0
    %499 = vmatprep.subr.mxu0 0.0
    %500 = vmatpush1.msra.mxu0 0.0
    %501 = vmatprep.subr.mxu0 0.0
    %502 = vmatpush1.msra.mxu0 0.0
    %503 = vmatprep.subr.mxu0 0.0
    %504 = vmatpush1.msra.mxu0 0.0
    %505 = vmatprep.subr.mxu0 0.0
    %506 = vmatpush1.msra.mxu0 0.0
    %507 = vmatprep.subr.mxu0 0.0
    %508 = vmatpush1.msra.mxu0 0.0
    %509 = vmatprep.subr.mxu0 0.0
    %510 = vmatpush1.msra.mxu0 0.0
    %511 = vmatprep.subr.mxu0 0.0
    %512 = vmatpush1.msra.mxu0 0.0
    %513 = vmatprep.mubr.f32.mxu0 0.0
    %514 = vmatmul.mubr.f32.gmra.mrb[0].mxu0 %v447
    %v515 = vpop.f32.mrb[0].mxu0
    %v516 = vadd.f32 %v445, %v515
    %v517 = vpop.f32.mrb[0].mxu0
    %518 = vdwg.mxu0
    %v519 = vld [vmem:[%s12] sm:$0xff]
    %v520 = vld [vmem:[%s12 + $0x8] sm:$0xff]
    %v521 = vld [vmem:[%s12 + $0x10] sm:$0xff]
    %v522 = vld [vmem:[%s12 + $0x18] sm:$0xff]
    %v523 = vld [vmem:[%s13] sm:$0xff]
    %v524 = vld [vmem:[%s13 + $0x8] sm:$0xff]
    %v525 = vld [vmem:[%s13 + $0x10] sm:$0xff]
    %v526 = vld [vmem:[%s13 + $0x18] sm:$0xff]
    %528 = vset.pattern.permute.xlu0 0
    %529 = vperm.xlu0 %528, %v523
    %v530 = vpop.permute.xlu0 %529
    %533 = vset.pattern.permute.xlu0 0
    %534 = vperm.xlu0 %533, %v524
    %v535 = vpop.permute.xlu0 %534
    %538 = vset.pattern.permute.xlu0 0
    %539 = vperm.xlu0 %538, %v525
    %v540 = vpop.permute.xlu0 %539
    %543 = vset.pattern.permute.xlu0 0
    %544 = vperm.xlu0 %543, %v526
    %v545 = vpop.permute.xlu0 %544
    %v548 = vsel %vm175, %v519, 0
    %v551 = vsel %vm175, %v520, 0
    %v554 = vsel %vm175, %v521, 0
    %v557 = vsel %vm175, %v522, 0
    %559 = vmatprep.subr.mxu0 0.0
    %560 = vmatpush1.msra.mxu0 %v64
    %561 = vmatprep.subr.mxu0 0.0
    %562 = vmatpush1.msra.mxu0 %v65
    %563 = vmatprep.subr.mxu0 0.0
    %564 = vmatpush1.msra.mxu0 0.0
    %565 = vmatprep.subr.mxu0 0.0
    %566 = vmatpush1.msra.mxu0 0.0
    %567 = vmatprep.subr.mxu0 0.0
    %568 = vmatpush1.msra.mxu0 0.0
    %569 = vmatprep.subr.mxu0 0.0
    %570 = vmatpush1.msra.mxu0 0.0
    %571 = vmatprep.subr.mxu0 0.0
    %572 = vmatpush1.msra.mxu0 0.0
    %573 = vmatprep.subr.mxu0 0.0
    %574 = vmatpush1.msra.mxu0 0.0
    %575 = vmatprep.subr.mxu0 0.0
    %576 = vmatpush1.msra.mxu0 0.0
    %577 = vmatprep.subr.mxu0 0.0
    %578 = vmatpush1.msra.mxu0 0.0
    %579 = vmatprep.subr.mxu0 0.0
    %580 = vmatpush1.msra.mxu0 0.0
    %581 = vmatprep.subr.mxu0 0.0
    %582 = vmatpush1.msra.mxu0 0.0
    %583 = vmatprep.subr.mxu0 0.0
    %584 = vmatpush1.msra.mxu0 0.0
    %585 = vmatprep.subr.mxu0 0.0
    %586 = vmatpush1.msra.mxu0 0.0
    %587 = vmatprep.subr.mxu0 0.0
    %588 = vmatpush1.msra.mxu0 0.0
    %589 = vmatprep.subr.mxu0 0.0
    %590 = vmatpush1.msra.mxu0 0.0
    %591 = vmatprep.subr.mxu0 0.0
    %592 = vmatpush1.msra.mxu0 0.0
    %593 = vmatprep.subr.mxu0 0.0
    %594 = vmatpush1.msra.mxu0 0.0
    %595 = vmatprep.subr.mxu0 0.0
    %596 = vmatpush1.msra.mxu0 0.0
    %597 = vmatprep.subr.mxu0 0.0
    %598 = vmatpush1.msra.mxu0 0.0
    %599 = vmatprep.subr.mxu0 0.0
    %600 = vmatpush1.msra.mxu0 0.0
    %601 = vmatprep.subr.mxu0 0.0
    %602 = vmatpush1.msra.mxu0 0.0
    %603 = vmatprep.subr.mxu0 0.0
    %604 = vmatpush1.msra.mxu0 0.0
    %605 = vmatprep.subr.mxu0 0.0
    %606 = vmatpush1.msra.mxu0 0.0
    %607 = vmatprep.subr.mxu0 0.0
    %608 = vmatpush1.msra.mxu0 0.0
    %609 = vmatprep.subr.mxu0 0.0
    %610 = vmatpush1.msra.mxu0 0.0
    %611 = vmatprep.subr.mxu0 0.0
    %612 = vmatpush1.msra.mxu0 0.0
    %613 = vmatprep.subr.mxu0 0.0
    %614 = vmatpush1.msra.mxu0 0.0
    %615 = vmatprep.subr.mxu0 0.0
    %616 = vmatpush1.msra.mxu0 0.0
    %617 = vmatprep.subr.mxu0 0.0
    %618 = vmatpush1.msra.mxu0 0.0
    %619 = vmatprep.subr.mxu0 0.0
    %620 = vmatpush1.msra.mxu0 0.0
    %621 = vmatprep.subr.mxu0 0.0
    %622 = vmatpush1.msra.mxu0 0.0
    %623 = vmatprep.mubr.f32.mxu0 0.0
    %624 = vmatmul.mubr.f32.gmra.mrb[0].mxu0 %v548
    %v625 = vpop.f32.mrb[0].mxu0
    %v626 = vadd.f32 %v530, %v625
    %v627 = vpop.f32.mrb[0].mxu0
    %628 = vmatprep.mubr.f32.mxu0 0.0
    %629 = vmatmul.mubr.f32.gmra.mrb[0].mxu0 %v551
    %v630 = vpop.f32.mrb[0].mxu0
    %v631 = vadd.f32 %v535, %v630
    %v632 = vpop.f32.mrb[0].mxu0
    %633 = vmatprep.mubr.f32.mxu0 0.0
    %634 = vmatmul.mubr.f32.gmra.mrb[0].mxu0 %v554
    %v635 = vpop.f32.mrb[0].mxu0
    %v636 = vadd.f32 %v540, %v635
    %v637 = vpop.f32.mrb[0].mxu0
    %638 = vmatprep.mubr.f32.mxu0 0.0
    %639 = vmatmul.mubr.f32.gmra.mrb[0].mxu0 %v557
    %v640 = vpop.f32.mrb[0].mxu0
    %v641 = vadd.f32 %v545, %v640
    %v642 = vpop.f32.mrb[0].mxu0
    %643 = vdwg.mxu0
    %v644 = vmax.f32 %v626, 0.0
    %v645 = vmax.f32 %v631, 0.0
    %v646 = vmax.f32 %v636, 0.0
    %v647 = vmax.f32 %v641, 0.0
    %v648 = vld [vmem:[%s14] sm:$0xff]
    %v649 = vld [vmem:[%s14 + $0x8] sm:$0xff]
    %v650 = vld [vmem:[%s14 + $0x10] sm:$0xff]
    %v651 = vld [vmem:[%s14 + $0x18] sm:$0xff]
    %v652 = vld [vmem:[%s15] sm:$0xff]
    %v653 = vld [vmem:[%s15 + $0x8] sm:$0xff]
    %v654 = vld [vmem:[%s15 + $0x10] sm:$0xff]
    %v655 = vld [vmem:[%s15 + $0x18] sm:$0xff]
    %657 = vset.pattern.permute.xlu0 0
    %658 = vperm.xlu0 %657, %v652
    %v659 = vpop.permute.xlu0 %658
    %662 = vset.pattern.permute.xlu0 0
    %663 = vperm.xlu0 %662, %v653
    %v664 = vpop.permute.xlu0 %663
    %667 = vset.pattern.permute.xlu0 0
    %668 = vperm.xlu0 %667, %v654
    %v669 = vpop.permute.xlu0 %668
    %672 = vset.pattern.permute.xlu0 0
    %673 = vperm.xlu0 %672, %v655
    %v674 = vpop.permute.xlu0 %673
    %v677 = vsel %vm333, %v648, 0
    %v680 = vsel %vm333, %v649, 0
    %v683 = vsel %vm333, %v650, 0
    %v686 = vsel %vm333, %v651, 0
    %688 = vmatprep.subr.mxu0 0.0
    %689 = vmatpush1.msra.mxu0 %v644
    %690 = vmatprep.subr.mxu0 0.0
    %691 = vmatpush1.msra.mxu0 %v645
    %692 = vmatprep.subr.mxu0 0.0
    %693 = vmatpush1.msra.mxu0 %v646
    %694 = vmatprep.subr.mxu0 0.0
    %695 = vmatpush1.msra.mxu0 %v647
    %696 = vmatprep.subr.mxu0 0.0
    %697 = vmatpush1.msra.mxu0 0.0
    %698 = vmatprep.subr.mxu0 0.0
    %699 = vmatpush1.msra.mxu0 0.0
    %700 = vmatprep.subr.mxu0 0.0
    %701 = vmatpush1.msra.mxu0 0.0
    %702 = vmatprep.subr.mxu0 0.0
    %703 = vmatpush1.msra.mxu0 0.0
    %704 = vmatprep.subr.mxu0 0.0
    %705 = vmatpush1.msra.mxu0 0.0
    %706 = vmatprep.subr.mxu0 0.0
    %707 = vmatpush1.msra.mxu0 0.0
    %708 = vmatprep.subr.mxu0 0.0
    %709 = vmatpush1.msra.mxu0 0.0
    %710 = vmatprep.subr.mxu0 0.0
    %711 = vmatpush1.msra.mxu0 0.0
    %712 = vmatprep.subr.mxu0 0.0
    %713 = vmatpush1.msra.mxu0 0.0
    %714 = vmatprep.subr.mxu0 0.0
    %715 = vmatpush1.msra.mxu0 0.0
    %716 = vmatprep.subr.mxu0 0.0
    %717 = vmatpush1.msra.mxu0 0.0
    %718 = vmatprep.subr.mxu0 0.0
    %719 = vmatpush1.msra.mxu0 0.0
    %720 = vmatprep.subr.mxu0 0.0
    %721 = vmatpush1.msra.mxu0 0.0
    %722 = vmatprep.subr.mxu0 0.0
    %723 = vmatpush1.msra.mxu0 0.0
    %724 = vmatprep.subr.mxu0 0.0
    %725 = vmatpush1.msra.mxu0 0.0
    %726 = vmatprep.subr.mxu0 0.0
    %727 = vmatpush1.msra.mxu0 0.0
    %728 = vmatprep.subr.mxu0 0.0
    %729 = vmatpush1.msra.mxu0 0.0
    %730 = vmatprep.subr.mxu0 0.0
    %731 = vmatpush1.msra.mxu0 0.0
    %732 = vmatprep.subr.mxu0 0.0
    %733 = vmatpush1.msra.mxu0 0.0
    %734 = vmatprep.subr.mxu0 0.0
    %735 = vmatpush1.msra.mxu0 0.0
    %736 = vmatprep.subr.mxu0 0.0
    %737 = vmatpush1.msra.mxu0 0.0
    %738 = vmatprep.subr.mxu0 0.0
    %739 = vmatpush1.msra.mxu0 0.0
    %740 = vmatprep.subr.mxu0 0.0
    %741 = vmatpush1.msra.mxu0 0.0
    %742 = vmatprep.subr.mxu0 0.0
    %743 = vmatpush1.msra.mxu0 0.0
    %744 = vmatprep.subr.mxu0 0.0
    %745 = vmatpush1.msra.mxu0 0.0
    %746 = vmatprep.subr.mxu0 0.0
    %747 = vmatpush1.msra.mxu0 0.0
    %748 = vmatprep.subr.mxu0 0.0
    %749 = vmatpush1.msra.mxu0 0.0
    %750 = vmatprep.subr.mxu0 0.0
    %751 = vmatpush1.msra.mxu0 0.0
    %752 = vmatprep.mubr.f32.mxu0 0.0
    %753 = vmatmul.mubr.f32.gmra.mrb[0].mxu0 %v677
    %v754 = vpop.f32.mrb[0].mxu0
    %v755 = vadd.f32 %v659, %v754
    %v756 = vpop.f32.mrb[0].mxu0
    %757 = vmatprep.mubr.f32.mxu0 0.0
    %758 = vmatmul.mubr.f32.gmra.mrb[0].mxu0 %v680
    %v759 = vpop.f32.mrb[0].mxu0
    %v760 = vadd.f32 %v664, %v759
    %v761 = vpop.f32.mrb[0].mxu0
    %762 = vmatprep.mubr.f32.mxu0 0.0
    %763 = vmatmul.mubr.f32.gmra.mrb[0].mxu0 %v683
    %v764 = vpop.f32.mrb[0].mxu0
    %v765 = vadd.f32 %v669, %v764
    %v766 = vpop.f32.mrb[0].mxu0
    %767 = vmatprep.mubr.f32.mxu0 0.0
    %768 = vmatmul.mubr.f32.gmra.mrb[0].mxu0 %v686
    %v769 = vpop.f32.mrb[0].mxu0
    %v770 = vadd.f32 %v674, %v769
    %v771 = vpop.f32.mrb[0].mxu0
    %772 = vdwg.mxu0
    %v773 = vmax.f32 %v755, 0.0
    %v774 = vmax.f32 %v760, 0.0
    %v775 = vmax.f32 %v765, 0.0
    %v776 = vmax.f32 %v770, 0.0
    %v777 = vld [vmem:[%s16] sm:$0x1]
    %v778 = vld [vmem:[#allocation3] sm:$0x1]
    %780 = vset.pattern.permute.xlu0 0
    %781 = vperm.xlu0 %780, %v778
    %v782 = vpop.permute.xlu0 %781
    %v784 = vlaneseq
    %v785 = vshrl.u32 %v784, 7
    %v786 = vsub.s32 0, %v785
    %v787 = vrot.slane %v782, %v786
    %v789 = vsel %vm333, %v777, 0
    %791 = vmatprep.subr.mxu0 0.0
    %792 = vmatpush1.msra.mxu0 %v773
    %793 = vmatprep.subr.mxu0 0.0
    %794 = vmatpush1.msra.mxu0 %v774
    %795 = vmatprep.subr.mxu0 0.0
    %796 = vmatpush1.msra.mxu0 %v775
    %797 = vmatprep.subr.mxu0 0.0
    %798 = vmatpush1.msra.mxu0 %v776
    %799 = vmatprep.subr.mxu0 0.0
    %800 = vmatpush1.msra.mxu0 0.0
    %801 = vmatprep.subr.mxu0 0.0
    %802 = vmatpush1.msra.mxu0 0.0
    %803 = vmatprep.subr.mxu0 0.0
    %804 = vmatpush1.msra.mxu0 0.0
    %805 = vmatprep.subr.mxu0 0.0
    %806 = vmatpush1.msra.mxu0 0.0
    %807 = vmatprep.subr.mxu0 0.0
    %808 = vmatpush1.msra.mxu0 0.0
    %809 = vmatprep.subr.mxu0 0.0
    %810 = vmatpush1.msra.mxu0 0.0
    %811 = vmatprep.subr.mxu0 0.0
    %812 = vmatpush1.msra.mxu0 0.0
    %813 = vmatprep.subr.mxu0 0.0
    %814 = vmatpush1.msra.mxu0 0.0
    %815 = vmatprep.subr.mxu0 0.0
    %816 = vmatpush1.msra.mxu0 0.0
    %817 = vmatprep.subr.mxu0 0.0
    %818 = vmatpush1.msra.mxu0 0.0
    %819 = vmatprep.subr.mxu0 0.0
    %820 = vmatpush1.msra.mxu0 0.0
    %821 = vmatprep.subr.mxu0 0.0
    %822 = vmatpush1.msra.mxu0 0.0
    %823 = vmatprep.subr.mxu0 0.0
    %824 = vmatpush1.msra.mxu0 0.0
    %825 = vmatprep.subr.mxu0 0.0
    %826 = vmatpush1.msra.mxu0 0.0
    %827 = vmatprep.subr.mxu0 0.0
    %828 = vmatpush1.msra.mxu0 0.0
    %829 = vmatprep.subr.mxu0 0.0
    %830 = vmatpush1.msra.mxu0 0.0
    %831 = vmatprep.subr.mxu0 0.0
    %832 = vmatpush1.msra.mxu0 0.0
    %833 = vmatprep.subr.mxu0 0.0
    %834 = vmatpush1.msra.mxu0 0.0
    %835 = vmatprep.subr.mxu0 0.0
    %836 = vmatpush1.msra.mxu0 0.0
    %837 = vmatprep.subr.mxu0 0.0
    %838 = vmatpush1.msra.mxu0 0.0
    %839 = vmatprep.subr.mxu0 0.0
    %840 = vmatpush1.msra.mxu0 0.0
    %841 = vmatprep.subr.mxu0 0.0
    %842 = vmatpush1.msra.mxu0 0.0
    %843 = vmatprep.subr.mxu0 0.0
    %844 = vmatpush1.msra.mxu0 0.0
    %845 = vmatprep.subr.mxu0 0.0
    %846 = vmatpush1.msra.mxu0 0.0
    %847 = vmatprep.subr.mxu0 0.0
    %848 = vmatpush1.msra.mxu0 0.0
    %849 = vmatprep.subr.mxu0 0.0
    %850 = vmatpush1.msra.mxu0 0.0
    %851 = vmatprep.subr.mxu0 0.0
    %852 = vmatpush1.msra.mxu0 0.0
    %853 = vmatprep.subr.mxu0 0.0
    %854 = vmatpush1.msra.mxu0 0.0
    %855 = vmatprep.mubr.f32.mxu0 0.0
    %856 = vmatmul.mubr.f32.gmra.mrb[0].mxu0 %v789
    %v857 = vpop.f32.mrb[0].mxu0
    %v858 = vadd.f32 %v787, %v857
    %v859 = vpop.f32.mrb[0].mxu0
    %860 = vdwg.mxu0
    %861 = vmatprep.subr.mxu0 0.0
    %862 = vmatpush1.msra.mxu0 %v67
    %863 = vmatprep.subr.mxu0 0.0
    %864 = vmatpush1.msra.mxu0 %v68
    %865 = vmatprep.subr.mxu0 0.0
    %866 = vmatpush1.msra.mxu0 0.0
    %867 = vmatprep.subr.mxu0 0.0
    %868 = vmatpush1.msra.mxu0 0.0
    %869 = vmatprep.subr.mxu0 0.0
    %870 = vmatpush1.msra.mxu0 0.0
    %871 = vmatprep.subr.mxu0 0.0
    %872 = vmatpush1.msra.mxu0 0.0
    %873 = vmatprep.subr.mxu0 0.0
    %874 = vmatpush1.msra.mxu0 0.0
    %875 = vmatprep.subr.mxu0 0.0
    %876 = vmatpush1.msra.mxu0 0.0
    %877 = vmatprep.subr.mxu0 0.0
    %878 = vmatpush1.msra.mxu0 0.0
    %879 = vmatprep.subr.mxu0 0.0
    %880 = vmatpush1.msra.mxu0 0.0
    %881 = vmatprep.subr.mxu0 0.0
    %882 = vmatpush1.msra.mxu0 0.0
    %883 = vmatprep.subr.mxu0 0.0
    %884 = vmatpush1.msra.mxu0 0.0
    %885 = vmatprep.subr.mxu0 0.0
    %886 = vmatpush1.msra.mxu0 0.0
    %887 = vmatprep.subr.mxu0 0.0
    %888 = vmatpush1.msra.mxu0 0.0
    %889 = vmatprep.subr.mxu0 0.0
    %890 = vmatpush1.msra.mxu0 0.0
    %891 = vmatprep.subr.mxu0 0.0
    %892 = vmatpush1.msra.mxu0 0.0
    %893 = vmatprep.subr.mxu0 0.0
    %894 = vmatpush1.msra.mxu0 0.0
    %895 = vmatprep.subr.mxu0 0.0
    %896 = vmatpush1.msra.mxu0 0.0
    %897 = vmatprep.subr.mxu0 0.0
    %898 = vmatpush1.msra.mxu0 0.0
    %899 = vmatprep.subr.mxu0 0.0
    %900 = vmatpush1.msra.mxu0 0.0
    %901 = vmatprep.subr.mxu0 0.0
    %902 = vmatpush1.msra.mxu0 0.0
    %903 = vmatprep.subr.mxu0 0.0
    %904 = vmatpush1.msra.mxu0 0.0
    %905 = vmatprep.subr.mxu0 0.0
    %906 = vmatpush1.msra.mxu0 0.0
    %907 = vmatprep.subr.mxu0 0.0
    %908 = vmatpush1.msra.mxu0 0.0
    %909 = vmatprep.subr.mxu0 0.0
    %910 = vmatpush1.msra.mxu0 0.0
    %911 = vmatprep.subr.mxu0 0.0
    %912 = vmatpush1.msra.mxu0 0.0
    %913 = vmatprep.subr.mxu0 0.0
    %914 = vmatpush1.msra.mxu0 0.0
    %915 = vmatprep.subr.mxu0 0.0
    %916 = vmatpush1.msra.mxu0 0.0
    %917 = vmatprep.subr.mxu0 0.0
    %918 = vmatpush1.msra.mxu0 0.0
    %919 = vmatprep.subr.mxu0 0.0
    %920 = vmatpush1.msra.mxu0 0.0
    %921 = vmatprep.subr.mxu0 0.0
    %922 = vmatpush1.msra.mxu0 0.0
    %923 = vmatprep.subr.mxu0 0.0
    %924 = vmatpush1.msra.mxu0 0.0
    %925 = vmatprep.mubr.f32.mxu0 0.0
    %926 = vmatmul.mubr.f32.gmra.mrb[0].mxu0 %v548
    %v927 = vpop.f32.mrb[0].mxu0
    %v928 = vadd.f32 %v530, %v927
    %v929 = vpop.f32.mrb[0].mxu0
    %930 = vmatprep.mubr.f32.mxu0 0.0
    %931 = vmatmul.mubr.f32.gmra.mrb[0].mxu0 %v551
    %v932 = vpop.f32.mrb[0].mxu0
    %v933 = vadd.f32 %v535, %v932
    %v934 = vpop.f32.mrb[0].mxu0
    %935 = vmatprep.mubr.f32.mxu0 0.0
    %936 = vmatmul.mubr.f32.gmra.mrb[0].mxu0 %v554
    %v937 = vpop.f32.mrb[0].mxu0
    %v938 = vadd.f32 %v540, %v937
    %v939 = vpop.f32.mrb[0].mxu0
    %940 = vmatprep.mubr.f32.mxu0 0.0
    %941 = vmatmul.mubr.f32.gmra.mrb[0].mxu0 %v557
    %v942 = vpop.f32.mrb[0].mxu0
    %v943 = vadd.f32 %v545, %v942
    %v944 = vpop.f32.mrb[0].mxu0
    %945 = vdwg.mxu0
    %v946 = vmax.f32 %v928, 0.0
    %v947 = vmax.f32 %v933, 0.0
    %v948 = vmax.f32 %v938, 0.0
    %v949 = vmax.f32 %v943, 0.0
    %950 = vmatprep.subr.mxu0 0.0
    %951 = vmatpush1.msra.mxu0 %v946
    %952 = vmatprep.subr.mxu0 0.0
    %953 = vmatpush1.msra.mxu0 %v947
    %954 = vmatprep.subr.mxu0 0.0
    %955 = vmatpush1.msra.mxu0 %v948
    %956 = vmatprep.subr.mxu0 0.0
    %957 = vmatpush1.msra.mxu0 %v949
    %958 = vmatprep.subr.mxu0 0.0
    %959 = vmatpush1.msra.mxu0 0.0
    %960 = vmatprep.subr.mxu0 0.0
    %961 = vmatpush1.msra.mxu0 0.0
    %962 = vmatprep.subr.mxu0 0.0
    %963 = vmatpush1.msra.mxu0 0.0
    %964 = vmatprep.subr.mxu0 0.0
    %965 = vmatpush1.msra.mxu0 0.0
    %966 = vmatprep.subr.mxu0 0.0
    %967 = vmatpush1.msra.mxu0 0.0
    %968 = vmatprep.subr.mxu0 0.0
    %969 = vmatpush1.msra.mxu0 0.0
    %970 = vmatprep.subr.mxu0 0.0
    %971 = vmatpush1.msra.mxu0 0.0
    %972 = vmatprep.subr.mxu0 0.0
    %973 = vmatpush1.msra.mxu0 0.0
    %974 = vmatprep.subr.mxu0 0.0
    %975 = vmatpush1.msra.mxu0 0.0
    %976 = vmatprep.subr.mxu0 0.0
    %977 = vmatpush1.msra.mxu0 0.0
    %978 = vmatprep.subr.mxu0 0.0
    %979 = vmatpush1.msra.mxu0 0.0
    %980 = vmatprep.subr.mxu0 0.0
    %981 = vmatpush1.msra.mxu0 0.0
    %982 = vmatprep.subr.mxu0 0.0
    %983 = vmatpush1.msra.mxu0 0.0
    %984 = vmatprep.subr.mxu0 0.0
    %985 = vmatpush1.msra.mxu0 0.0
    %986 = vmatprep.subr.mxu0 0.0
    %987 = vmatpush1.msra.mxu0 0.0
    %988 = vmatprep.subr.mxu0 0.0
    %989 = vmatpush1.msra.mxu0 0.0
    %990 = vmatprep.subr.mxu0 0.0
    %991 = vmatpush1.msra.mxu0 0.0
    %992 = vmatprep.subr.mxu0 0.0
    %993 = vmatpush1.msra.mxu0 0.0
    %994 = vmatprep.subr.mxu0 0.0
    %995 = vmatpush1.msra.mxu0 0.0
    %996 = vmatprep.subr.mxu0 0.0
    %997 = vmatpush1.msra.mxu0 0.0
    %998 = vmatprep.subr.mxu0 0.0
    %999 = vmatpush1.msra.mxu0 0.0
    %1000 = vmatprep.subr.mxu0 0.0
    %1001 = vmatpush1.msra.mxu0 0.0
    %1002 = vmatprep.subr.mxu0 0.0
    %1003 = vmatpush1.msra.mxu0 0.0
    %1004 = vmatprep.subr.mxu0 0.0
    %1005 = vmatpush1.msra.mxu0 0.0
    %1006 = vmatprep.subr.mxu0 0.0
    %1007 = vmatpush1.msra.mxu0 0.0
    %1008 = vmatprep.subr.mxu0 0.0
    %1009 = vmatpush1.msra.mxu0 0.0
    %1010 = vmatprep.subr.mxu0 0.0
    %1011 = vmatpush1.msra.mxu0 0.0
    %1012 = vmatprep.subr.mxu0 0.0
    %1013 = vmatpush1.msra.mxu0 0.0
    %1014 = vmatprep.mubr.f32.mxu0 0.0
    %1015 = vmatmul.mubr.f32.gmra.mrb[0].mxu0 %v677
    %v1016 = vpop.f32.mrb[0].mxu0
    %v1017 = vadd.f32 %v659, %v1016
    %v1018 = vpop.f32.mrb[0].mxu0
    %1019 = vmatprep.mubr.f32.mxu0 0.0
    %1020 = vmatmul.mubr.f32.gmra.mrb[0].mxu0 %v680
    %v1021 = vpop.f32.mrb[0].mxu0
    %v1022 = vadd.f32 %v664, %v1021
    %v1023 = vpop.f32.mrb[0].mxu0
    %1024 = vmatprep.mubr.f32.mxu0 0.0
    %1025 = vmatmul.mubr.f32.gmra.mrb[0].mxu0 %v683
    %v1026 = vpop.f32.mrb[0].mxu0
    %v1027 = vadd.f32 %v669, %v1026
    %v1028 = vpop.f32.mrb[0].mxu0
    %1029 = vmatprep.mubr.f32.mxu0 0.0
    %1030 = vmatmul.mubr.f32.gmra.mrb[0].mxu0 %v686
    %v1031 = vpop.f32.mrb[0].mxu0
    %v1032 = vadd.f32 %v674, %v1031
    %v1033 = vpop.f32.mrb[0].mxu0
    %1034 = vdwg.mxu0
    %v1035 = vmax.f32 %v1017, 0.0
    %v1036 = vmax.f32 %v1022, 0.0
    %v1037 = vmax.f32 %v1027, 0.0
    %v1038 = vmax.f32 %v1032, 0.0
    %1039 = vmatprep.subr.mxu0 0.0
    %1040 = vmatpush1.msra.mxu0 %v1035
    %1041 = vmatprep.subr.mxu0 0.0
    %1042 = vmatpush1.msra.mxu0 %v1036
    %1043 = vmatprep.subr.mxu0 0.0
    %1044 = vmatpush1.msra.mxu0 %v1037
    %1045 = vmatprep.subr.mxu0 0.0
    %1046 = vmatpush1.msra.mxu0 %v1038
    %1047 = vmatprep.subr.mxu0 0.0
    %1048 = vmatpush1.msra.mxu0 0.0
    %1049 = vmatprep.subr.mxu0 0.0
    %1050 = vmatpush1.msra.mxu0 0.0
    %1051 = vmatprep.subr.mxu0 0.0
    %1052 = vmatpush1.msra.mxu0 0.0
    %1053 = vmatprep.subr.mxu0 0.0
    %1054 = vmatpush1.msra.mxu0 0.0
    %1055 = vmatprep.subr.mxu0 0.0
    %1056 = vmatpush1.msra.mxu0 0.0
    %1057 = vmatprep.subr.mxu0 0.0
    %1058 = vmatpush1.msra.mxu0 0.0
    %1059 = vmatprep.subr.mxu0 0.0
    %1060 = vmatpush1.msra.mxu0 0.0
    %1061 = vmatprep.subr.mxu0 0.0
    %1062 = vmatpush1.msra.mxu0 0.0
    %1063 = vmatprep.subr.mxu0 0.0
    %1064 = vmatpush1.msra.mxu0 0.0
    %1065 = vmatprep.subr.mxu0 0.0
    %1066 = vmatpush1.msra.mxu0 0.0
    %1067 = vmatprep.subr.mxu0 0.0
    %1068 = vmatpush1.msra.mxu0 0.0
    %1069 = vmatprep.subr.mxu0 0.0
    %1070 = vmatpush1.msra.mxu0 0.0
    %1071 = vmatprep.subr.mxu0 0.0
    %1072 = vmatpush1.msra.mxu0 0.0
    %1073 = vmatprep.subr.mxu0 0.0
    %1074 = vmatpush1.msra.mxu0 0.0
    %1075 = vmatprep.subr.mxu0 0.0
    %1076 = vmatpush1.msra.mxu0 0.0
    %1077 = vmatprep.subr.mxu0 0.0
    %1078 = vmatpush1.msra.mxu0 0.0
    %1079 = vmatprep.subr.mxu0 0.0
    %1080 = vmatpush1.msra.mxu0 0.0
    %1081 = vmatprep.subr.mxu0 0.0
    %1082 = vmatpush1.msra.mxu0 0.0
    %1083 = vmatprep.subr.mxu0 0.0
    %1084 = vmatpush1.msra.mxu0 0.0
    %1085 = vmatprep.subr.mxu0 0.0
    %1086 = vmatpush1.msra.mxu0 0.0
    %1087 = vmatprep.subr.mxu0 0.0
    %1088 = vmatpush1.msra.mxu0 0.0
    %1089 = vmatprep.subr.mxu0 0.0
    %1090 = vmatpush1.msra.mxu0 0.0
    %1091 = vmatprep.subr.mxu0 0.0
    %1092 = vmatpush1.msra.mxu0 0.0
    %1093 = vmatprep.subr.mxu0 0.0
    %1094 = vmatpush1.msra.mxu0 0.0
    %1095 = vmatprep.subr.mxu0 0.0
    %1096 = vmatpush1.msra.mxu0 0.0
    %1097 = vmatprep.subr.mxu0 0.0
    %1098 = vmatpush1.msra.mxu0 0.0
    %1099 = vmatprep.subr.mxu0 0.0
    %1100 = vmatpush1.msra.mxu0 0.0
    %1101 = vmatprep.subr.mxu0 0.0
    %1102 = vmatpush1.msra.mxu0 0.0
    %1103 = vmatprep.mubr.f32.mxu0 0.0
    %1104 = vmatmul.mubr.f32.gmra.mrb[0].mxu0 %v789
    %v1105 = vpop.f32.mrb[0].mxu0
    %v1106 = vadd.f32 %v787, %v1105
    %v1107 = vpop.f32.mrb[0].mxu0
    %1108 = vdwg.mxu0
    %v1109 = vld [vmem:[%s3] sm:$0x1]
    %v1110 = vmul.f32 %v1109, 0.99
    %v1111 = vmul.f32 %v1110, %v1106
    %v1112 = vadd.f32 %v516, %v1111
    %v1113 = vsub.f32 %v1112, %v858
    %v1114 = vld [vmem:[%s4] sm:$0x1]
    %v1115 = vsub.f32 %v1113, %v1114
    %1116 = vst [vmem:[#allocation4] sm:$0x1] %v1115
    // Predicated region
    $region74: #{tpu_custom_call.1} parent=1 // pred_check
      _
    $region75: #{tpu_custom_call.1} parent=1 // pred_check_branch
      %1118 = sbr.rel (0) target = $region77
    $region76: #{tpu_custom_call.1} parent=1 // pred_region
      %s1120 = ssub.s32 16, 16
      %1121 = vsyncadd [#allocation5], %s1120
      %s1123 = sshll.u32 [#allocation4], 4
      %s1124 = int_to_ptr.vmem [resolvable:$true] %s1123
      %1126 = dma.vmem_to_hbm [thread:$0]  %s1124, 16, %s18, [#allocation5]
    $region77: #{tpu_custom_call.1} parent=1 // pred_fallthru
      _
    // Predicated region
    $region78: #{tpu_custom_call.1} parent=1 // pred_check
      _
    $region79: #{tpu_custom_call.1} parent=1 // pred_check_branch
      %1128 = sbr.rel (0) target = $region81
    $region80: #{tpu_custom_call.1} parent=1 // pred_region
      %1129 = dma.done [#allocation5], 16
    $region81: #{tpu_custom_call.1} parent=1 // pred_fallthru
      _
    %1130 = vsyncpa [#allocation5], 1

</llo_original>
